<compile_context>
chip_gen: v6e
topology: v6e:2x2x1
jax: 0.10.0
libtpu: 0.0.40
codegen_flags: <defaults>
</compile_context>

<pallas_src>
import functools

import jax
import jax.numpy as jnp
from jax import lax
from jax.experimental import pallas as pl
from jax.experimental.pallas import tpu as pltpu

# WATERSHED_ENERGY_BINS is an external constant in seggit; fixed here deterministically.
WATERSHED_ENERGY_BINS = (2, 5, 10, 20, 40)
N_ENERGY = len(WATERSHED_ENERGY_BINS) + 1  # = 6


def _we_loss_kernel(wclass_ref,                          # SMEM (C,)  (scalar prefetch)
                    logits_ref,                          # VMEM (C, TILE_S, 128)
                    energy_ref, semseg_ref, area_ref,    # VMEM (TILE_S, 128) each
                    num_ref, den_ref,                    # VMEM (1, 1) per-(image,tile) partials
                    *, hw, cs):
    n_cls, tile_s, _ = logits_ref.shape
    n_chunks = tile_s // cs
    j = pl.program_id(1)
    base_pix = j * (tile_s * 128)           # first pixel id covered by this block

    # Class weights: scalar SMEM reads hoisted out of the chunk loop.
    wvals = [wclass_ref[c] for c in range(n_cls)]

    # Loop-invariant pixel offsets within one (cs, 128) chunk.
    offs = (lax.broadcasted_iota(jnp.int32, (cs, 128), 0) * 128
            + lax.broadcasted_iota(jnp.int32, (cs, 128), 1))

    def chunk(t, carry):
        num_acc, den_acc = carry            # (8, 128) f32 each
        s0 = pl.multiple_of(t * cs, cs)

        def xrow(c):
            # Re-read class rows from VMEM (3 vld/cycle) instead of keeping
            # all of them live -> no vreg spills.
            return logits_ref[c, pl.ds(s0, cs), :].astype(jnp.float32)

        # log-sum-exp over the tiny (unrolled) class axis: pure VPU/EUP work.
        m = xrow(0)
        for c in range(1, n_cls):
            m = jnp.maximum(m, xrow(c))

        # .astype(int32) truncates toward zero == torch .long() for the
        # non-negative integer-valued energy labels used by this module.
        tgt = energy_ref[pl.ds(s0, cs), :].astype(jnp.int32)

        s = jnp.zeros_like(m)
        logit_y = jnp.zeros_like(m)
        w_y = jnp.zeros_like(m)
        for c in range(n_cls):
            xc = xrow(c)
            s = s + jnp.exp(xc - m)
            sel = tgt == c
            logit_y = jnp.where(sel, xc, logit_y)
            w_y = jnp.where(sel, wvals[c], w_y)
        lse = jnp.log(s) + m

        # Validity: real pixel (ragged last tile / 128-pad tail) AND semseg != 0.
        lim = hw - (base_pix + s0 * 128)
        valid = offs < lim
        m_all = valid & (semseg_ref[pl.ds(s0, cs), :].astype(jnp.float32) != 0.0)

        safe_area = jnp.where(m_all, area_ref[pl.ds(s0, cs), :].astype(jnp.float32), 1.0)
        wp = lax.rsqrt(safe_area)           # 1/sqrt(area), single EUP op

        nll = lse - logit_y                 # -log p[y]
        # jnp.where (NOT mask-multiplication): garbage tail data may be
        # NaN/Inf and must not poison the accumulators.
        num_c = jnp.where(m_all, w_y * wp * nll, 0.0)
        den_c = jnp.where(m_all, w_y, 0.0)

        # Fold the (cs,128) chunk contribution onto the (8,128) accumulators
        # (vreg-aligned sublane slices -> cheap adds).
        for k in range(cs // 8):
            num_acc = num_acc + num_c[k * 8:(k + 1) * 8, :]
            den_acc = den_acc + den_c[k * 8:(k + 1) * 8, :]
        return num_acc, den_acc

    zeros8 = jnp.zeros((8, 128), jnp.float32)
    num_acc, den_acc = lax.fori_loop(0, n_chunks, chunk, (zeros8, zeros8),
                                     unroll=min(4, n_chunks))

    # One cross-sublane + cross-lane reduce per (image, tile) grid step.
    num_ref[...] = jnp.sum(jnp.sum(num_acc, axis=0, keepdims=True), axis=1, keepdims=True)
    den_ref[...] = jnp.sum(jnp.sum(den_acc, axis=0, keepdims=True), axis=1, keepdims=True)


def _round_up(x, m):
    return ((x + m - 1) // m) * m


@functools.partial(jax.jit, static_argnames=("tile_sublanes",))
def watershed_energy_loss(logits, energy, semseg, area, weight_energy,
                          tile_sublanes=256):
    n, c, h, w = logits.shape
    hw = h * w

    # Sublane-dense layout: pixels -> (sublane, lane) = (hw/128, 128).
    # For typical image sizes h*w is a multiple of 1024, the reshapes below
    # are free views of the contiguous NCHW buffers (no pad, no HBM copy).
    hw_pad = _round_up(hw, 8 * 128)
    s_arr = hw_pad // 128                      # sublane rows, multiple of 8

    lg = logits.reshape(n, c, hw)
    en = energy.reshape(n, 1, hw)
    ss = semseg.reshape(n, 1, hw)
    ar = area.reshape(n, 1, hw)
    if hw_pad != hw:
        # Fallback for odd sizes only: minimal pad so the sublane count is a
        # multiple of 8; padded pixels are dropped by the in-kernel mask.
        pad = ((0, 0), (0, 0), (0, hw_pad - hw))
        lg = jnp.pad(lg, pad)
        en = jnp.pad(en, pad)
        ss = jnp.pad(ss, pad)
        ar = jnp.pad(ar, pad)
    lg = lg.reshape(n, c, s_arr, 128)
    en = en.reshape(n, 1, s_arr, 128)
    ss = ss.reshape(n, 1, s_arr, 128)
    ar = ar.reshape(n, 1, s_arr, 128)
    wc = weight_energy.reshape(c).astype(jnp.float32)

    # DMA tile (sublanes): multiple of 8, default 256 (= 32768 pixels,
    # ~1.1 MiB/step for f32 inputs; ~2.3 MiB double-buffered -> fits the
    # default scoped VMEM on v5e/v6e/v7x).
    tile_s = min(max(8, _round_up(tile_sublanes, 8)), s_arr)
    cs = 16 if tile_s % 16 == 0 else 8         # compute chunk: 2048 / 1024 pixels
    n_tiles = pl.cdiv(s_arr, tile_s)           # ragged last tile masked in-kernel

    kernel = functools.partial(_we_loss_kernel, hw=hw, cs=cs)

    num, den = pl.pallas_call(
        kernel,
        out_shape=(jax.ShapeDtypeStruct((n, n_tiles, 1, 1), jnp.float32),
                   jax.ShapeDtypeStruct((n, n_tiles, 1, 1), jnp.float32)),
        grid_spec=pltpu.PrefetchScalarGridSpec(
            num_scalar_prefetch=1,
            grid=(n, n_tiles),
            in_specs=[
                pl.BlockSpec((None, c, tile_s, 128), lambda i, j, wref: (i, 0, j, 0)),      # logits
                pl.BlockSpec((None, None, tile_s, 128), lambda i, j, wref: (i, 0, j, 0)),   # energy
                pl.BlockSpec((None, None, tile_s, 128), lambda i, j, wref: (i, 0, j, 0)),   # semseg
                pl.BlockSpec((None, None, tile_s, 128), lambda i, j, wref: (i, 0, j, 0)),   # area
            ],
            out_specs=(
                pl.BlockSpec((None, None, 1, 1), lambda i, j, wref: (i, j, 0, 0)),          # num partial
                pl.BlockSpec((None, None, 1, 1), lambda i, j, wref: (i, j, 0, 0)),          # den partial
            ),
        ),
        compiler_params=pltpu.CompilerParams(
            dimension_semantics=("parallel", "parallel")),   # both axes shardable on v7x
    )(wc, lg, en, ss, ar)

    # NOTE: matches PyTorch NLLLoss(mean): if no pixel is masked, den == 0 and
    # the result is NaN (same 0/0 behavior as the original module).
    return jnp.sum(num) / jnp.sum(den)


def _reference_loss(logits, energy, semseg, area, weight_energy):
    """Pure-JAX reference mirroring the PyTorch module."""
    n, c, h, w = logits.shape
    lg = jnp.transpose(logits, (0, 2, 3, 1)).reshape(-1, c)
    en = energy.reshape(-1).astype(jnp.int32)
    ss = semseg.reshape(-1)
    ar = area.reshape(-1)
    mask = ss != 0.0
    logp = jax.nn.log_softmax(lg, axis=1)
    wp = jnp.where(mask, 1.0 / jnp.sqrt(jnp.where(mask, ar, 1.0)), 0.0)
    onehot = jax.nn.one_hot(en, c, dtype=jnp.float32)
    logp_y = jnp.sum(onehot * logp, axis=1)
    w_y = jnp.sum(onehot * weight_energy[None, :], axis=1)
    maskf = mask.astype(jnp.float32)
    num = jnp.sum(maskf * w_y * wp * (-logp_y))
    den = jnp.sum(maskf * w_y)
    return num / den


if __name__ == "__main__":
    key = jax.random.PRNGKey(0)
    C = N_ENERGY
    # weight_energy = arange(n_energy, 0, -1), as in the module __init__
    weight_energy = jnp.arange(C, 0, -1).astype(jnp.float32)

    # (N, H, W, tile_sublanes): aligned single-tile, multi-tile grid, and
    # odd-size (pad + ragged-mask) fallback.
    cases = [
        (2, 32, 32, 256),
        (2, 32, 64, 8),
        (1, 16, 24, 256),
    ]

    ok = True
    for idx, (N, H, W, ts) in enumerate(cases):
        key, k1, k2, k3, k4 = jax.random.split(key, 5)
        logits = jax.random.normal(k1, (N, C, H, W), dtype=jnp.float32)
        energy = jax.random.randint(k2, (N, 1, H, W), 0, C).astype(jnp.float32)
        semseg = (jax.random.uniform(k3, (N, 1, H, W)) > 0.4).astype(jnp.float32)
        area = jax.random.uniform(k4, (N, 1, H, W), minval=1.0, maxval=100.0)

        loss = watershed_energy_loss(logits, energy, semseg, area,
                                     weight_energy, tile_sublanes=ts)
        loss = jax.block_until_ready(loss)
        ref = _reference_loss(logits, energy, semseg, area, weight_energy)
        if not jnp.allclose(loss, ref, rtol=1e-4, atol=1e-4):
            ok = False
            print(f"MISMATCH case {idx}: kernel={loss} ref={ref}")

    assert ok
    print("KERNEL_OK")
</pallas_src>

<mosaic_0001>
module attributes {stable_mosaic.version = 11 : i64} {
  func.func @_we_loss_kernel(%arg0: i32, %arg1: i32, %arg2: memref<6xf32, #tpu.memory_space<smem>>, %arg3: memref<1x6x8x128xf32, #tpu.memory_space<vmem>>, %arg4: memref<1x1x8x128xf32, #tpu.memory_space<vmem>>, %arg5: memref<1x1x8x128xf32, #tpu.memory_space<vmem>>, %arg6: memref<1x1x8x128xf32, #tpu.memory_space<vmem>>, %arg7: memref<1x1x1x1xf32, #tpu.memory_space<vmem>>, %arg8: memref<1x1x1x1xf32, #tpu.memory_space<vmem>>) attributes {dimension_semantics = [#tpu.dimension_semantics<parallel>, #tpu.dimension_semantics<parallel>], iteration_bounds = array<i64: 2, 1>, scalar_prefetch = 1 : i64, scratch_operands = 0 : i64, tpu.core_type = #tpu.core_type<tc>, window_params = [{transform_indices = @transform_0, window_bounds = array<i64: 1, 6, 8, 128>}, {transform_indices = @transform_1, window_bounds = array<i64: 1, 1, 8, 128>}, {transform_indices = @transform_2, window_bounds = array<i64: 1, 1, 8, 128>}, {transform_indices = @transform_3, window_bounds = array<i64: 1, 1, 8, 128>}, {transform_indices = @transform_4, window_bounds = array<i64: 1, 1, 1, 1>}, {transform_indices = @transform_5, window_bounds = array<i64: 1, 1, 1, 1>}]} {
    %c1024_i32 = arith.constant 1024 : i32
    %0 = arith.muli %arg1, %c1024_i32 : i32
    %c0 = arith.constant 0 : index
    %1 = memref.load %arg2[%c0] : memref<6xf32, #tpu.memory_space<smem>>
    %c1 = arith.constant 1 : index
    %2 = memref.load %arg2[%c1] : memref<6xf32, #tpu.memory_space<smem>>
    %c2 = arith.constant 2 : index
    %3 = memref.load %arg2[%c2] : memref<6xf32, #tpu.memory_space<smem>>
    %c3 = arith.constant 3 : index
    %4 = memref.load %arg2[%c3] : memref<6xf32, #tpu.memory_space<smem>>
    %c4 = arith.constant 4 : index
    %5 = memref.load %arg2[%c4] : memref<6xf32, #tpu.memory_space<smem>>
    %c5 = arith.constant 5 : index
    %6 = memref.load %arg2[%c5] : memref<6xf32, #tpu.memory_space<smem>>
    %7 = tpu.iota {dimensions = array<i32: 0>} : vector<8x128xi32>
    %c128_i32 = arith.constant 128 : i32
    %8 = vector.broadcast %c128_i32 : i32 to vector<8x128xi32>
    %9 = arith.muli %7, %8 : vector<8x128xi32>
    %10 = tpu.iota {dimensions = array<i32: 1>} : vector<8x128xi32>
    %11 = arith.addi %9, %10 : vector<8x128xi32>
    %cst = arith.constant 0.000000e+00 : f32
    %12 = vector.broadcast %cst : f32 to vector<8x128xf32>
    %c0_i32 = arith.constant 0 : i32
    %c8_i32 = arith.constant 8 : i32
    %13 = arith.muli %c0_i32, %c8_i32 : i32
    %14 = tpu.assume_multiple %13, 8 : i32
    %c0_0 = arith.constant 0 : index
    %c0_1 = arith.constant 0 : index
    %15 = arith.index_cast %14 : i32 to index
    %c0_2 = arith.constant 0 : index
    %16 = vector.load %arg3[%c0_0, %c0_1, %15, %c0_2] : memref<1x6x8x128xf32, #tpu.memory_space<vmem>>, vector<1x1x8x128xf32>
    %17 = vector.shape_cast %16 : vector<1x1x8x128xf32> to vector<8x128xf32>
    %c0_3 = arith.constant 0 : index
    %c1_4 = arith.constant 1 : index
    %18 = arith.index_cast %14 : i32 to index
    %c0_5 = arith.constant 0 : index
    %19 = vector.load %arg3[%c0_3, %c1_4, %18, %c0_5] : memref<1x6x8x128xf32, #tpu.memory_space<vmem>>, vector<1x1x8x128xf32>
    %20 = vector.shape_cast %19 : vector<1x1x8x128xf32> to vector<8x128xf32>
    %21 = arith.maximumf %17, %20 : vector<8x128xf32>
    %c0_6 = arith.constant 0 : index
    %c2_7 = arith.constant 2 : index
    %22 = arith.index_cast %14 : i32 to index
    %c0_8 = arith.constant 0 : index
    %23 = vector.load %arg3[%c0_6, %c2_7, %22, %c0_8] : memref<1x6x8x128xf32, #tpu.memory_space<vmem>>, vector<1x1x8x128xf32>
    %24 = vector.shape_cast %23 : vector<1x1x8x128xf32> to vector<8x128xf32>
    %25 = arith.maximumf %21, %24 : vector<8x128xf32>
    %c0_9 = arith.constant 0 : index
    %c3_10 = arith.constant 3 : index
    %26 = arith.index_cast %14 : i32 to index
    %c0_11 = arith.constant 0 : index
    %27 = vector.load %arg3[%c0_9, %c3_10, %26, %c0_11] : memref<1x6x8x128xf32, #tpu.memory_space<vmem>>, vector<1x1x8x128xf32>
    %28 = vector.shape_cast %27 : vector<1x1x8x128xf32> to vector<8x128xf32>
    %29 = arith.maximumf %25, %28 : vector<8x128xf32>
    %c0_12 = arith.constant 0 : index
    %c4_13 = arith.constant 4 : index
    %30 = arith.index_cast %14 : i32 to index
    %c0_14 = arith.constant 0 : index
    %31 = vector.load %arg3[%c0_12, %c4_13, %30, %c0_14] : memref<1x6x8x128xf32, #tpu.memory_space<vmem>>, vector<1x1x8x128xf32>
    %32 = vector.shape_cast %31 : vector<1x1x8x128xf32> to vector<8x128xf32>
    %33 = arith.maximumf %29, %32 : vector<8x128xf32>
    %c0_15 = arith.constant 0 : index
    %c5_16 = arith.constant 5 : index
    %34 = arith.index_cast %14 : i32 to index
    %c0_17 = arith.constant 0 : index
    %35 = vector.load %arg3[%c0_15, %c5_16, %34, %c0_17] : memref<1x6x8x128xf32, #tpu.memory_space<vmem>>, vector<1x1x8x128xf32>
    %36 = vector.shape_cast %35 : vector<1x1x8x128xf32> to vector<8x128xf32>
    %37 = arith.maximumf %33, %36 : vector<8x128xf32>
    %c0_18 = arith.constant 0 : index
    %c0_19 = arith.constant 0 : index
    %38 = arith.index_cast %14 : i32 to index
    %c0_20 = arith.constant 0 : index
    %39 = vector.load %arg4[%c0_18, %c0_19, %38, %c0_20] : memref<1x1x8x128xf32, #tpu.memory_space<vmem>>, vector<1x1x8x128xf32>
    %40 = vector.shape_cast %39 : vector<1x1x8x128xf32> to vector<8x128xf32>
    %41 = arith.fptosi %40 : vector<8x128xf32> to vector<8x128xi32>
    %cst_21 = arith.constant 0.000000e+00 : f32
    %42 = vector.broadcast %cst_21 : f32 to vector<8x128xf32>
    %cst_22 = arith.constant 0.000000e+00 : f32
    %43 = vector.broadcast %cst_22 : f32 to vector<8x128xf32>
    %cst_23 = arith.constant 0.000000e+00 : f32
    %44 = vector.broadcast %cst_23 : f32 to vector<8x128xf32>
    %c0_24 = arith.constant 0 : index
    %c0_25 = arith.constant 0 : index
    %45 = arith.index_cast %14 : i32 to index
    %c0_26 = arith.constant 0 : index
    %46 = vector.load %arg3[%c0_24, %c0_25, %45, %c0_26] : memref<1x6x8x128xf32, #tpu.memory_space<vmem>>, vector<1x1x8x128xf32>
    %47 = vector.shape_cast %46 : vector<1x1x8x128xf32> to vector<8x128xf32>
    %48 = arith.subf %47, %37 : vector<8x128xf32>
    %49 = math.exp %48 : vector<8x128xf32>
    %50 = arith.addf %42, %49 : vector<8x128xf32>
    %c0_i32_27 = arith.constant 0 : i32
    %51 = vector.broadcast %c0_i32_27 : i32 to vector<8x128xi32>
    %52 = arith.cmpi eq, %41, %51 : vector<8x128xi32>
    %53 = arith.select %52, %47, %43 : vector<8x128xi1>, vector<8x128xf32>
    %54 = vector.broadcast %1 : f32 to vector<8x128xf32>
    %55 = arith.select %52, %54, %44 : vector<8x128xi1>, vector<8x128xf32>
    %c0_28 = arith.constant 0 : index
    %c1_29 = arith.constant 1 : index
    %56 = arith.index_cast %14 : i32 to index
    %c0_30 = arith.constant 0 : index
    %57 = vector.load %arg3[%c0_28, %c1_29, %56, %c0_30] : memref<1x6x8x128xf32, #tpu.memory_space<vmem>>, vector<1x1x8x128xf32>
    %58 = vector.shape_cast %57 : vector<1x1x8x128xf32> to vector<8x128xf32>
    %59 = arith.subf %58, %37 : vector<8x128xf32>
    %60 = math.exp %59 : vector<8x128xf32>
    %61 = arith.addf %50, %60 : vector<8x128xf32>
    %c1_i32 = arith.constant 1 : i32
    %62 = vector.broadcast %c1_i32 : i32 to vector<8x128xi32>
    %63 = arith.cmpi eq, %41, %62 : vector<8x128xi32>
    %64 = arith.select %63, %58, %53 : vector<8x128xi1>, vector<8x128xf32>
    %65 = vector.broadcast %2 : f32 to vector<8x128xf32>
    %66 = arith.select %63, %65, %55 : vector<8x128xi1>, vector<8x128xf32>
    %c0_31 = arith.constant 0 : index
    %c2_32 = arith.constant 2 : index
    %67 = arith.index_cast %14 : i32 to index
    %c0_33 = arith.constant 0 : index
    %68 = vector.load %arg3[%c0_31, %c2_32, %67, %c0_33] : memref<1x6x8x128xf32, #tpu.memory_space<vmem>>, vector<1x1x8x128xf32>
    %69 = vector.shape_cast %68 : vector<1x1x8x128xf32> to vector<8x128xf32>
    %70 = arith.subf %69, %37 : vector<8x128xf32>
    %71 = math.exp %70 : vector<8x128xf32>
    %72 = arith.addf %61, %71 : vector<8x128xf32>
    %c2_i32 = arith.constant 2 : i32
    %73 = vector.broadcast %c2_i32 : i32 to vector<8x128xi32>
    %74 = arith.cmpi eq, %41, %73 : vector<8x128xi32>
    %75 = arith.select %74, %69, %64 : vector<8x128xi1>, vector<8x128xf32>
    %76 = vector.broadcast %3 : f32 to vector<8x128xf32>
    %77 = arith.select %74, %76, %66 : vector<8x128xi1>, vector<8x128xf32>
    %c0_34 = arith.constant 0 : index
    %c3_35 = arith.constant 3 : index
    %78 = arith.index_cast %14 : i32 to index
    %c0_36 = arith.constant 0 : index
    %79 = vector.load %arg3[%c0_34, %c3_35, %78, %c0_36] : memref<1x6x8x128xf32, #tpu.memory_space<vmem>>, vector<1x1x8x128xf32>
    %80 = vector.shape_cast %79 : vector<1x1x8x128xf32> to vector<8x128xf32>
    %81 = arith.subf %80, %37 : vector<8x128xf32>
    %82 = math.exp %81 : vector<8x128xf32>
    %83 = arith.addf %72, %82 : vector<8x128xf32>
    %c3_i32 = arith.constant 3 : i32
    %84 = vector.broadcast %c3_i32 : i32 to vector<8x128xi32>
    %85 = arith.cmpi eq, %41, %84 : vector<8x128xi32>
    %86 = arith.select %85, %80, %75 : vector<8x128xi1>, vector<8x128xf32>
    %87 = vector.broadcast %4 : f32 to vector<8x128xf32>
    %88 = arith.select %85, %87, %77 : vector<8x128xi1>, vector<8x128xf32>
    %c0_37 = arith.constant 0 : index
    %c4_38 = arith.constant 4 : index
    %89 = arith.index_cast %14 : i32 to index
    %c0_39 = arith.constant 0 : index
    %90 = vector.load %arg3[%c0_37, %c4_38, %89, %c0_39] : memref<1x6x8x128xf32, #tpu.memory_space<vmem>>, vector<1x1x8x128xf32>
    %91 = vector.shape_cast %90 : vector<1x1x8x128xf32> to vector<8x128xf32>
    %92 = arith.subf %91, %37 : vector<8x128xf32>
    %93 = math.exp %92 : vector<8x128xf32>
    %94 = arith.addf %83, %93 : vector<8x128xf32>
    %c4_i32 = arith.constant 4 : i32
    %95 = vector.broadcast %c4_i32 : i32 to vector<8x128xi32>
    %96 = arith.cmpi eq, %41, %95 : vector<8x128xi32>
    %97 = arith.select %96, %91, %86 : vector<8x128xi1>, vector<8x128xf32>
    %98 = vector.broadcast %5 : f32 to vector<8x128xf32>
    %99 = arith.select %96, %98, %88 : vector<8x128xi1>, vector<8x128xf32>
    %c0_40 = arith.constant 0 : index
    %c5_41 = arith.constant 5 : index
    %100 = arith.index_cast %14 : i32 to index
    %c0_42 = arith.constant 0 : index
    %101 = vector.load %arg3[%c0_40, %c5_41, %100, %c0_42] : memref<1x6x8x128xf32, #tpu.memory_space<vmem>>, vector<1x1x8x128xf32>
    %102 = vector.shape_cast %101 : vector<1x1x8x128xf32> to vector<8x128xf32>
    %103 = arith.subf %102, %37 : vector<8x128xf32>
    %104 = math.exp %103 : vector<8x128xf32>
    %105 = arith.addf %94, %104 : vector<8x128xf32>
    %c5_i32 = arith.constant 5 : i32
    %106 = vector.broadcast %c5_i32 : i32 to vector<8x128xi32>
    %107 = arith.cmpi eq, %41, %106 : vector<8x128xi32>
    %108 = arith.select %107, %102, %97 : vector<8x128xi1>, vector<8x128xf32>
    %109 = vector.broadcast %6 : f32 to vector<8x128xf32>
    %110 = arith.select %107, %109, %99 : vector<8x128xi1>, vector<8x128xf32>
    %111 = math.log %105 : vector<8x128xf32>
    %112 = arith.addf %111, %37 : vector<8x128xf32>
    %c128_i32_43 = arith.constant 128 : i32
    %113 = arith.muli %14, %c128_i32_43 : i32
    %114 = arith.addi %0, %113 : i32
    %c1024_i32_44 = arith.constant 1024 : i32
    %115 = arith.subi %c1024_i32_44, %114 : i32
    %116 = vector.broadcast %115 : i32 to vector<8x128xi32>
    %117 = arith.cmpi slt, %11, %116 : vector<8x128xi32>
    %c0_45 = arith.constant 0 : index
    %c0_46 = arith.constant 0 : index
    %118 = arith.index_cast %14 : i32 to index
    %c0_47 = arith.constant 0 : index
    %119 = vector.load %arg5[%c0_45, %c0_46, %118, %c0_47] : memref<1x1x8x128xf32, #tpu.memory_space<vmem>>, vector<1x1x8x128xf32>
    %120 = vector.shape_cast %119 : vector<1x1x8x128xf32> to vector<8x128xf32>
    %cst_48 = arith.constant 0.000000e+00 : f32
    %121 = vector.broadcast %cst_48 : f32 to vector<8x128xf32>
    %122 = arith.cmpf one, %120, %121 : vector<8x128xf32>
    %123 = arith.andi %117, %122 : vector<8x128xi1>
    %c0_49 = arith.constant 0 : index
    %c0_50 = arith.constant 0 : index
    %124 = arith.index_cast %14 : i32 to index
    %c0_51 = arith.constant 0 : index
    %125 = vector.load %arg6[%c0_49, %c0_50, %124, %c0_51] : memref<1x1x8x128xf32, #tpu.memory_space<vmem>>, vector<1x1x8x128xf32>
    %126 = vector.shape_cast %125 : vector<1x1x8x128xf32> to vector<8x128xf32>
    %cst_52 = arith.constant 1.000000e+00 : f32
    %127 = vector.broadcast %cst_52 : f32 to vector<8x128xf32>
    %128 = arith.select %123, %126, %127 : vector<8x128xi1>, vector<8x128xf32>
    %129 = math.rsqrt %128 : vector<8x128xf32>
    %130 = arith.subf %112, %108 : vector<8x128xf32>
    %131 = arith.mulf %110, %129 : vector<8x128xf32>
    %132 = arith.mulf %131, %130 : vector<8x128xf32>
    %cst_53 = arith.constant 0.000000e+00 : f32
    %133 = vector.broadcast %cst_53 : f32 to vector<8x128xf32>
    %134 = arith.select %123, %132, %133 : vector<8x128xi1>, vector<8x128xf32>
    %cst_54 = arith.constant 0.000000e+00 : f32
    %135 = vector.broadcast %cst_54 : f32 to vector<8x128xf32>
    %136 = arith.select %123, %110, %135 : vector<8x128xi1>, vector<8x128xf32>
    %137 = arith.addf %12, %134 : vector<8x128xf32>
    %138 = arith.addf %12, %136 : vector<8x128xf32>
    %c1_i32_55 = arith.constant 1 : i32
    %cst_56 = arith.constant dense<0.000000e+00> : vector<128xf32>
    %139 = vector.multi_reduction <add>, %137, %cst_56 [0] : vector<8x128xf32> to vector<128xf32>
    %140 = vector.shape_cast %139 : vector<128xf32> to vector<1x128xf32>
    %cst_57 = arith.constant dense<0.000000e+00> : vector<1xf32>
    %141 = vector.multi_reduction <add>, %140, %cst_57 [1] : vector<1x128xf32> to vector<1xf32>
    %142 = vector.shape_cast %141 : vector<1xf32> to vector<1x1xf32>
    %c0_58 = arith.constant 0 : index
    %c0_59 = arith.constant 0 : index
    %c0_60 = arith.constant 0 : index
    %c0_61 = arith.constant 0 : index
    %143 = vector.load %arg7[%c0_58, %c0_59, %c0_60, %c0_61] : memref<1x1x1x1xf32, #tpu.memory_space<vmem>>, vector<1x1x1x1xf32>
    %144 = vector.shape_cast %143 : vector<1x1x1x1xf32> to vector<1x1xf32>
    %145 = vector.shape_cast %142 : vector<1x1xf32> to vector<1x1x1x1xf32>
    tpu.vector_store %arg7[%c0_58, %c0_59, %c0_60, %c0_61], %145 {strides = array<i32>} : memref<1x1x1x1xf32, #tpu.memory_space<vmem>>, vector<1x1x1x1xf32>,
    %cst_62 = arith.constant dense<0.000000e+00> : vector<128xf32>
    %146 = vector.multi_reduction <add>, %138, %cst_62 [0] : vector<8x128xf32> to vector<128xf32>
    %147 = vector.shape_cast %146 : vector<128xf32> to vector<1x128xf32>
    %cst_63 = arith.constant dense<0.000000e+00> : vector<1xf32>
    %148 = vector.multi_reduction <add>, %147, %cst_63 [1] : vector<1x128xf32> to vector<1xf32>
    %149 = vector.shape_cast %148 : vector<1xf32> to vector<1x1xf32>
    %c0_64 = arith.constant 0 : index
    %c0_65 = arith.constant 0 : index
    %c0_66 = arith.constant 0 : index
    %c0_67 = arith.constant 0 : index
    %150 = vector.load %arg8[%c0_64, %c0_65, %c0_66, %c0_67] : memref<1x1x1x1xf32, #tpu.memory_space<vmem>>, vector<1x1x1x1xf32>
    %151 = vector.shape_cast %150 : vector<1x1x1x1xf32> to vector<1x1xf32>
    %152 = vector.shape_cast %149 : vector<1x1xf32> to vector<1x1x1x1xf32>
    tpu.vector_store %arg8[%c0_64, %c0_65, %c0_66, %c0_67], %152 {strides = array<i32>} : memref<1x1x1x1xf32, #tpu.memory_space<vmem>>, vector<1x1x1x1xf32>,
    return
  }
  func.func @transform_0(%arg0: i32, %arg1: i32, %arg2: memref<6xf32, #tpu.memory_space<smem>>) -> (i32, i32, i32, i32) {
    %c0_i32 = arith.constant 0 : i32
    %c0_i32_0 = arith.constant 0 : i32
    %c0_i32_1 = arith.constant 0 : i32
    return %arg0, %c0_i32, %arg1, %c0_i32_0 : i32, i32, i32, i32
  }
  func.func @transform_1(%arg0: i32, %arg1: i32, %arg2: memref<6xf32, #tpu.memory_space<smem>>) -> (i32, i32, i32, i32) {
    %c0_i32 = arith.constant 0 : i32
    %c0_i32_0 = arith.constant 0 : i32
    %c0_i32_1 = arith.constant 0 : i32
    return %arg0, %c0_i32, %arg1, %c0_i32_0 : i32, i32, i32, i32
  }
  func.func @transform_2(%arg0: i32, %arg1: i32, %arg2: memref<6xf32, #tpu.memory_space<smem>>) -> (i32, i32, i32, i32) {
    %c0_i32 = arith.constant 0 : i32
    %c0_i32_0 = arith.constant 0 : i32
    %c0_i32_1 = arith.constant 0 : i32
    return %arg0, %c0_i32, %arg1, %c0_i32_0 : i32, i32, i32, i32
  }
  func.func @transform_3(%arg0: i32, %arg1: i32, %arg2: memref<6xf32, #tpu.memory_space<smem>>) -> (i32, i32, i32, i32) {
    %c0_i32 = arith.constant 0 : i32
    %c0_i32_0 = arith.constant 0 : i32
    %c0_i32_1 = arith.constant 0 : i32
    return %arg0, %c0_i32, %arg1, %c0_i32_0 : i32, i32, i32, i32
  }
  func.func @transform_4(%arg0: i32, %arg1: i32, %arg2: memref<6xf32, #tpu.memory_space<smem>>) -> (i32, i32, i32, i32) {
    %c0_i32 = arith.constant 0 : i32
    %c0_i32_0 = arith.constant 0 : i32
    %c0_i32_1 = arith.constant 0 : i32
    return %arg0, %arg1, %c0_i32, %c0_i32_0 : i32, i32, i32, i32
  }
  func.func @transform_5(%arg0: i32, %arg1: i32, %arg2: memref<6xf32, #tpu.memory_space<smem>>) -> (i32, i32, i32, i32) {
    %c0_i32 = arith.constant 0 : i32
    %c0_i32_0 = arith.constant 0 : i32
    %c0_i32_1 = arith.constant 0 : i32
    return %arg0, %arg1, %c0_i32, %c0_i32_0 : i32, i32, i32, i32
  }
}

</mosaic_0001>

<llo_original>
// kernel: watershed_energy_loss.1
$region0: #{watershed_energy_loss.1}
  #allocation0 [shape = 'u32[]', space=smem, size = 0x4, offset = 0x4, fixed_abs, tag = 'smem constant byte address 0x4 - core index']
  #allocation1 [shape = 'u32[144,128]{1,0:T(1,128)}', space=vmem, size = 0x12000, scoped, tag = 'internal scratch']
  #allocation2 [shape = 's32[1]{0}', space=sflag, size = 0x4, scoped, tag = 'scoped memory for watershed_energy_loss.1']
  #allocation3 [shape = 'u8[512]{0}', space=smem, size = 0x200, scoped, tag = 'prefetched SMEM operand 0']
  %s0 = inlined_call_operand.vmem [shape: f32[6], index: 0, kind: input, shape index: {}]
  %s1 = inlined_call_operand.vmem [shape: f32[2,6,8,128], index: 1, kind: input, shape index: {}]
  %s2 = inlined_call_operand.vmem [shape: f32[2,1,8,128], index: 2, kind: input, shape index: {}]
  %s3 = inlined_call_operand.vmem [shape: f32[2,1,8,128], index: 3, kind: input, shape index: {}]
  %s4 = inlined_call_operand.vmem [shape: f32[2,1,8,128], index: 4, kind: input, shape index: {}]
  %s5 = inlined_call_operand.vmem [shape: f32[2,1,1,1], index: 5, kind: output, shape index: {0}]
  %s6 = inlined_call_operand.vmem [shape: f32[2,1,1,1], index: 6, kind: output, shape index: {1}]
  %7 = xla_tuple %s5, %s6
  %s8 = sld [smem:[#allocation0]]
  $region57: #{watershed_energy_loss.1} parent=0
    _
  %s10 = ssub.s32 1, %s8
  %s11 = scalar_select 0, %s10, %s8
  %s12 = sshll.u32 %s0, 4
  %s13 = int_to_ptr.vmem [resolvable:$true] %s12
  %15 = dma.vmem_to_smem %s13, 16, [#allocation3], [#allocation2]
  %16 = dma.done [#allocation2], 16
  %17 = sfence
  loop: start=0, step=1, limit=4
  $region2: #{watershed_energy_loss.1} parent=0 // loop_pre_header
    _
  $region3: #{watershed_energy_loss.1} parent=0 // loop_header
    %s19 = sphi 0, %s23
    %p20 = scmp.ge.s32.totalorder %s19, 4
    %s26 = sphi 0, %s38
    %s27 = sphi 0, %s34
    %s28 = sphi 0, %s26
    %s29 = sphi 0, %s27
    %s30 = sphi 0, %s28
    %s31 = sphi 0, %s29
    %s43 = sphi 0, %s45
    %s46 = sphi 0, %s43
    %s47 = sphi 0, %s46
    %s63 = sphi 0, %s47
    %s71 = sphi 0, %s73
    %s74 = sphi 0, %s71
    %s75 = sphi 0, %s74
    %s91 = sphi 0, %s75
    %s99 = sphi 0, %s101
    %s102 = sphi 0, %s99
    %s103 = sphi 0, %s102
    %s119 = sphi 0, %s103
    %s127 = sphi 0, %s129
    %s130 = sphi 0, %s127
    %s131 = sphi 0, %s130
    %s147 = sphi 0, %s131
    %s155 = sphi 0, %s157
    %s158 = sphi 0, %s155
    %s159 = sphi 0, %s158
    %s175 = sphi 0, %s159
    %s183 = sphi 0, %s185
    %s186 = sphi 0, %s183
    %s187 = sphi 0, %s186
    %s203 = sphi 0, %s187
  $region4: #{watershed_energy_loss.1} parent=0 // loop_header_branch
    %22 = sbr.rel (%p20) target = $region8
  $region5: #{watershed_energy_loss.1} parent=0 // loop_body
    %s24 = ssub.s32 %s19, 1
    %s25 = ssub.s32 %s19, 2
    %s32 = sadd.s32 1, %s27
    %p33 = scmp.ge.s32.totalorder %s32, 1
    %s34 = scalar_select %p33, 0, %s32
    %s35 = sadd.s32 1, %s26
    %s36 = scalar_select %p33, %s35, %s26
    %p37 = scmp.ge.s32.totalorder %s36, 2
    %s38 = scalar_select %p37, 0, %s36
    %s39 = ssub.s32 %s26, %s38
    %s40 = ssub.s32 %s27, %s34
    %s41 = sor.u32 %s39, %s40
    %p42 = scmp.eq.s32.totalorder %s41, 0
    %s44 = sadd.s32 %s43, 1
    %s45 = scalar_select %p42, %s43, %s44
    %p48 = pneg %p42
    %p49 = scmp.eq.s32.totalorder %s19, 1
    %p50 = por %p48, %p49
    %p51 = scmp.ne.s32.totalorder %s43, %s46
    %p52 = scmp.eq.s32.totalorder %s19, 0
    %p53 = por %p51, %p52
    %p54 = scmp.ne.s32.totalorder %s43, %s46
    %p55 = scmp.eq.s32.totalorder %s24, 1
    %p56 = por %p54, %p55
    %p57 = scmp.ne.s32.totalorder %s46, %s47
    %p58 = scmp.eq.s32.totalorder %s24, 0
    %p59 = por %p57, %p58
    %p60 = scmp.ne.s32.totalorder %s46, %s47
    %p61 = scmp.eq.s32.totalorder %s25, 1
    %p62 = por %p60, %p61
    %p64 = scmp.ne.s32.totalorder %s47, %s63
    %p65 = scmp.eq.s32.totalorder %s25, 0
    %p66 = por %p64, %p65
    %s67 = ssub.s32 %s26, %s38
    %s68 = ssub.s32 %s27, %s34
    %s69 = sor.u32 %s67, %s68
    %p70 = scmp.eq.s32.totalorder %s69, 0
    %s72 = sadd.s32 %s71, 1
    %s73 = scalar_select %p70, %s71, %s72
    %p76 = pneg %p70
    %p77 = scmp.eq.s32.totalorder %s19, 1
    %p78 = por %p76, %p77
    %p79 = scmp.ne.s32.totalorder %s71, %s74
    %p80 = scmp.eq.s32.totalorder %s19, 0
    %p81 = por %p79, %p80
    %p82 = scmp.ne.s32.totalorder %s71, %s74
    %p83 = scmp.eq.s32.totalorder %s24, 1
    %p84 = por %p82, %p83
    %p85 = scmp.ne.s32.totalorder %s74, %s75
    %p86 = scmp.eq.s32.totalorder %s24, 0
    %p87 = por %p85, %p86
    %p88 = scmp.ne.s32.totalorder %s74, %s75
    %p89 = scmp.eq.s32.totalorder %s25, 1
    %p90 = por %p88, %p89
    %p92 = scmp.ne.s32.totalorder %s75, %s91
    %p93 = scmp.eq.s32.totalorder %s25, 0
    %p94 = por %p92, %p93
    %s95 = ssub.s32 %s26, %s38
    %s96 = ssub.s32 %s27, %s34
    %s97 = sor.u32 %s95, %s96
    %p98 = scmp.eq.s32.totalorder %s97, 0
    %s100 = sadd.s32 %s99, 1
    %s101 = scalar_select %p98, %s99, %s100
    %p104 = pneg %p98
    %p105 = scmp.eq.s32.totalorder %s19, 1
    %p106 = por %p104, %p105
    %p107 = scmp.ne.s32.totalorder %s99, %s102
    %p108 = scmp.eq.s32.totalorder %s19, 0
    %p109 = por %p107, %p108
    %p110 = scmp.ne.s32.totalorder %s99, %s102
    %p111 = scmp.eq.s32.totalorder %s24, 1
    %p112 = por %p110, %p111
    %p113 = scmp.ne.s32.totalorder %s102, %s103
    %p114 = scmp.eq.s32.totalorder %s24, 0
    %p115 = por %p113, %p114
    %p116 = scmp.ne.s32.totalorder %s102, %s103
    %p117 = scmp.eq.s32.totalorder %s25, 1
    %p118 = por %p116, %p117
    %p120 = scmp.ne.s32.totalorder %s103, %s119
    %p121 = scmp.eq.s32.totalorder %s25, 0
    %p122 = por %p120, %p121
    %s123 = ssub.s32 %s26, %s38
    %s124 = ssub.s32 %s27, %s34
    %s125 = sor.u32 %s123, %s124
    %p126 = scmp.eq.s32.totalorder %s125, 0
    %s128 = sadd.s32 %s127, 1
    %s129 = scalar_select %p126, %s127, %s128
    %p132 = pneg %p126
    %p133 = scmp.eq.s32.totalorder %s19, 1
    %p134 = por %p132, %p133
    %p135 = scmp.ne.s32.totalorder %s127, %s130
    %p136 = scmp.eq.s32.totalorder %s19, 0
    %p137 = por %p135, %p136
    %p138 = scmp.ne.s32.totalorder %s127, %s130
    %p139 = scmp.eq.s32.totalorder %s24, 1
    %p140 = por %p138, %p139
    %p141 = scmp.ne.s32.totalorder %s130, %s131
    %p142 = scmp.eq.s32.totalorder %s24, 0
    %p143 = por %p141, %p142
    %p144 = scmp.ne.s32.totalorder %s130, %s131
    %p145 = scmp.eq.s32.totalorder %s25, 1
    %p146 = por %p144, %p145
    %p148 = scmp.ne.s32.totalorder %s131, %s147
    %p149 = scmp.eq.s32.totalorder %s25, 0
    %p150 = por %p148, %p149
    %s151 = ssub.s32 %s26, %s38
    %s152 = ssub.s32 %s27, %s34
    %s153 = sor.u32 %s151, %s152
    %p154 = scmp.eq.s32.totalorder %s153, 0
    %s156 = sadd.s32 %s155, 1
    %s157 = scalar_select %p154, %s155, %s156
    %p160 = pneg %p154
    %p161 = scmp.eq.s32.totalorder %s19, 1
    %p162 = por %p160, %p161
    %p163 = scmp.ne.s32.totalorder %s155, %s158
    %p164 = scmp.eq.s32.totalorder %s19, 0
    %p165 = por %p163, %p164
    %p166 = scmp.ne.s32.totalorder %s155, %s158
    %p167 = scmp.eq.s32.totalorder %s24, 1
    %p168 = por %p166, %p167
    %p169 = scmp.ne.s32.totalorder %s158, %s159
    %p170 = scmp.eq.s32.totalorder %s24, 0
    %p171 = por %p169, %p170
    %p172 = scmp.ne.s32.totalorder %s158, %s159
    %p173 = scmp.eq.s32.totalorder %s25, 1
    %p174 = por %p172, %p173
    %p176 = scmp.ne.s32.totalorder %s159, %s175
    %p177 = scmp.eq.s32.totalorder %s25, 0
    %p178 = por %p176, %p177
    %s179 = ssub.s32 %s26, %s38
    %s180 = ssub.s32 %s27, %s34
    %s181 = sor.u32 %s179, %s180
    %p182 = scmp.eq.s32.totalorder %s181, 0
    %s184 = sadd.s32 %s183, 1
    %s185 = scalar_select %p182, %s183, %s184
    %p188 = pneg %p182
    %p189 = scmp.eq.s32.totalorder %s19, 1
    %p190 = por %p188, %p189
    %p191 = scmp.ne.s32.totalorder %s183, %s186
    %p192 = scmp.eq.s32.totalorder %s19, 0
    %p193 = por %p191, %p192
    %p194 = scmp.ne.s32.totalorder %s183, %s186
    %p195 = scmp.eq.s32.totalorder %s24, 1
    %p196 = por %p194, %p195
    %p197 = scmp.ne.s32.totalorder %s186, %s187
    %p198 = scmp.eq.s32.totalorder %s24, 0
    %p199 = por %p197, %p198
    %p200 = scmp.ne.s32.totalorder %s186, %s187
    %p201 = scmp.eq.s32.totalorder %s25, 1
    %p202 = por %p200, %p201
    %p204 = scmp.ne.s32.totalorder %s187, %s203
    %p205 = scmp.eq.s32.totalorder %s25, 0
    %p206 = por %p204, %p205
    %p207 = scmp.le.s32.totalorder 1, %s19
    %p208 = scmp.lt.s32.totalorder %s19, 3
    %p209 = pnand %p207, %p208
    %p210 = pneg %p209
    // Predicated region
    $region9: #{watershed_energy_loss.1} parent=5 // pred_check
      _
    $region10: #{watershed_energy_loss.1} parent=5 // pred_check_branch
      %212 = sbr.rel (%p209) target = $region12
    $region11: #{watershed_energy_loss.1} parent=5 // pred_region
      %s213 = ssub.s32 %s19, 1
    $region12: #{watershed_energy_loss.1} parent=5 // pred_fallthru
      _
    %p214 = scmp.lt.s32.totalorder %s19, 2
    // Predicated region
    $region13: #{watershed_energy_loss.1} parent=5 // pred_check
      %p215 = pneg %p214
    $region14: #{watershed_energy_loss.1} parent=5 // pred_check_branch
      %217 = sbr.rel (%p215) target = $region16
    $region15: #{watershed_energy_loss.1} parent=5 // pred_region
      // Predicated region
      $region17: #{watershed_energy_loss.1} parent=15 // pred_check
        %p218 = pneg %p53
      $region18: #{watershed_energy_loss.1} parent=15 // pred_check_branch
        %220 = sbr.rel (%p218) target = $region20
      $region19: #{watershed_energy_loss.1} parent=15 // pred_region
        %p221 = scmp.lt.s32.totalorder %s26, 1
        %s222 = scalar_select %p221, %s26, 1
        %p223 = scmp.lt.s32.totalorder %s27, 0
        %s224 = scalar_select %p223, %s27, 0
        %s225 = smul.addr %s222, 6
        %s226 = sadd.s32 %s224, %s225
        %s227 = smul.addr %s226, 8
        %s228 = scalar_lea.vmem %s1, %s227
      $region20: #{watershed_energy_loss.1} parent=15 // pred_fallthru
        _
      // Predicated region
      $region21: #{watershed_energy_loss.1} parent=15 // pred_check
        %p229 = pneg %p81
      $region22: #{watershed_energy_loss.1} parent=15 // pred_check_branch
        %231 = sbr.rel (%p229) target = $region24
      $region23: #{watershed_energy_loss.1} parent=15 // pred_region
        %p232 = scmp.lt.s32.totalorder %s26, 1
        %s233 = scalar_select %p232, %s26, 1
        %p234 = scmp.lt.s32.totalorder %s27, 0
        %s235 = scalar_select %p234, %s27, 0
        %s236 = sadd.s32 %s235, %s233
        %s237 = smul.addr %s236, 8
        %s238 = scalar_lea.vmem %s2, %s237
      $region24: #{watershed_energy_loss.1} parent=15 // pred_fallthru
        _
      // Predicated region
      $region25: #{watershed_energy_loss.1} parent=15 // pred_check
        %p239 = pneg %p109
      $region26: #{watershed_energy_loss.1} parent=15 // pred_check_branch
        %241 = sbr.rel (%p239) target = $region28
      $region27: #{watershed_energy_loss.1} parent=15 // pred_region
        %p242 = scmp.lt.s32.totalorder %s26, 1
        %s243 = scalar_select %p242, %s26, 1
        %p244 = scmp.lt.s32.totalorder %s27, 0
        %s245 = scalar_select %p244, %s27, 0
        %s246 = sadd.s32 %s245, %s243
        %s247 = smul.addr %s246, 8
        %s248 = scalar_lea.vmem %s3, %s247
      $region28: #{watershed_energy_loss.1} parent=15 // pred_fallthru
        _
      // Predicated region
      $region29: #{watershed_energy_loss.1} parent=15 // pred_check
        %p249 = pneg %p137
      $region30: #{watershed_energy_loss.1} parent=15 // pred_check_branch
        %251 = sbr.rel (%p249) target = $region32
      $region31: #{watershed_energy_loss.1} parent=15 // pred_region
        %p252 = scmp.lt.s32.totalorder %s26, 1
        %s253 = scalar_select %p252, %s26, 1
        %p254 = scmp.lt.s32.totalorder %s27, 0
        %s255 = scalar_select %p254, %s27, 0
        %s256 = sadd.s32 %s255, %s253
        %s257 = smul.addr %s256, 8
        %s258 = scalar_lea.vmem %s4, %s257
      $region32: #{watershed_energy_loss.1} parent=15 // pred_fallthru
        _
    $region16: #{watershed_energy_loss.1} parent=5 // pred_fallthru
      _
    %p259 = scmp.le.s32.totalorder 1, %s19
    %p260 = scmp.lt.s32.totalorder %s19, 3
    %p261 = pnand %p259, %p260
    %p262 = pneg %p261
    // Predicated region
    $region33: #{watershed_energy_loss.1} parent=5 // pred_check
      _
    $region34: #{watershed_energy_loss.1} parent=5 // pred_check_branch
      %264 = sbr.rel (%p261) target = $region36
    $region35: #{watershed_energy_loss.1} parent=5 // pred_region
      %s265 = ssub.s32 %s19, 1
      %p266 = scmp.lt.s32.totalorder %s28, 1
      %s267 = scalar_select %p266, %s28, 1
      %p268 = scmp.lt.s32.totalorder %s29, 0
      %s269 = scalar_select %p268, %s29, 0
      %s270 = smul.addr %s267, 6
      %s271 = sadd.s32 %s269, %s270
      %s272 = smul.addr %s271, 8
      %s273 = scalar_lea.vmem %s1, %s272
      %p274 = pneg %p59
      %p275 = pneg %p56
      %p276 = scmp.lt.s32.totalorder %s28, 1
      %s277 = scalar_select %p276, %s28, 1
      %p278 = scmp.lt.s32.totalorder %s29, 0
      %s279 = scalar_select %p278, %s29, 0
      %s280 = sadd.s32 %s279, %s277
      %s281 = smul.addr %s280, 8
      %s282 = scalar_lea.vmem %s2, %s281
      %p283 = pneg %p87
      %p284 = pneg %p84
      %p285 = scmp.lt.s32.totalorder %s28, 1
      %s286 = scalar_select %p285, %s28, 1
      %p287 = scmp.lt.s32.totalorder %s29, 0
      %s288 = scalar_select %p287, %s29, 0
      %s289 = sadd.s32 %s288, %s286
      %s290 = smul.addr %s289, 8
      %s291 = scalar_lea.vmem %s3, %s290
      %p292 = pneg %p115
      %p293 = pneg %p112
      %p294 = scmp.lt.s32.totalorder %s28, 1
      %s295 = scalar_select %p294, %s28, 1
      %p296 = scmp.lt.s32.totalorder %s29, 0
      %s297 = scalar_select %p296, %s29, 0
      %s298 = sadd.s32 %s297, %s295
      %s299 = smul.addr %s298, 8
      %s300 = scalar_lea.vmem %s4, %s299
      %p301 = pneg %p143
      %p302 = pneg %p140
      %p303 = pneg %p171
      %p304 = pneg %p168
      %p305 = scmp.lt.s32.totalorder %s28, 1
      %s306 = scalar_select %p305, %s28, 1
      %p307 = scmp.lt.s32.totalorder %s29, 0
      %s308 = scalar_select %p307, %s29, 0
      %s309 = sadd.s32 %s308, %s306
      %s310 = scalar_lea.vmem %s5, %s309
      %p311 = pneg %p199
      %p312 = pneg %p196
      %p313 = scmp.lt.s32.totalorder %s28, 1
      %s314 = scalar_select %p313, %s28, 1
      %p315 = scmp.lt.s32.totalorder %s29, 0
      %s316 = scalar_select %p315, %s29, 0
      %s317 = sadd.s32 %s316, %s314
      %s318 = scalar_lea.vmem %s6, %s317
      %p319 = scmp.lt.s32.totalorder %s28, 1
      %s320 = scalar_select %p319, %s28, 1
      %p321 = scmp.lt.s32.totalorder %s29, 0
      %s322 = scalar_select %p321, %s29, 0
      %s323 = smul.addr %s320, 6
      %s324 = sadd.s32 %s322, %s323
      %s325 = smul.addr %s324, 8
      %s326 = scalar_lea.vmem %s1, %s325
      %p327 = scmp.lt.s32.totalorder %s28, 1
      %s328 = scalar_select %p327, %s28, 1
      %p329 = scmp.lt.s32.totalorder %s29, 0
      %s330 = scalar_select %p329, %s29, 0
      %s331 = sadd.s32 %s330, %s328
      %s332 = smul.addr %s331, 8
      %s333 = scalar_lea.vmem %s2, %s332
      %p334 = scmp.lt.s32.totalorder %s28, 1
      %s335 = scalar_select %p334, %s28, 1
      %p336 = scmp.lt.s32.totalorder %s29, 0
      %s337 = scalar_select %p336, %s29, 0
      %s338 = sadd.s32 %s337, %s335
      %s339 = smul.addr %s338, 8
      %s340 = scalar_lea.vmem %s3, %s339
      %p341 = scmp.lt.s32.totalorder %s28, 1
      %s342 = scalar_select %p341, %s28, 1
      %p343 = scmp.lt.s32.totalorder %s29, 0
      %s344 = scalar_select %p343, %s29, 0
      %s345 = sadd.s32 %s344, %s342
      %s346 = smul.addr %s345, 8
      %s347 = scalar_lea.vmem %s4, %s346
      %p348 = scmp.lt.s32.totalorder %s28, 1
      %s349 = scalar_select %p348, %s28, 1
      %p350 = scmp.lt.s32.totalorder %s29, 0
      %s351 = scalar_select %p350, %s29, 0
      %s352 = sadd.s32 %s351, %s349
      %s353 = scalar_lea.vmem %s5, %s352
      %p354 = scmp.lt.s32.totalorder %s28, 1
      %s355 = scalar_select %p354, %s28, 1
      %p356 = scmp.lt.s32.totalorder %s29, 0
      %s357 = scalar_select %p356, %s29, 0
      %s358 = sadd.s32 %s357, %s355
      %s359 = scalar_lea.vmem %s6, %s358
      %s360 = smul.u32 %s29, 1024
      %s361 = sld [smem:[#allocation3]]
      %s362 = sld [smem:[#allocation3 + $0x1]]
      %s363 = sld [smem:[#allocation3 + $0x2]]
      %s364 = sld [smem:[#allocation3 + $0x3]]
      %s365 = sld [smem:[#allocation3 + $0x4]]
      %s366 = sld [smem:[#allocation3 + $0x5]]
      %v367 = vlaneseq
      %v368 = vshrl.u32 %v367, 7
      %v369 = vmul.u32 %v368, 128
      %v370 = vlaneseq
      %v371 = vand.u32 %v370, 127
      %v372 = vadd.s32 %v369, %v371
      %v373 = vld [vmem:[%s326] sm:$0xff]
      %s374 = sadd.s32 0, 8
      %s375 = scalar_lea.vmem %s326, %s374
      %v376 = vld [vmem:[%s375] sm:$0xff]
      %v377 = vmax.f32 %v373, %v376
      %s378 = sadd.s32 0, 16
      %s379 = scalar_lea.vmem %s326, %s378
      %v380 = vld [vmem:[%s379] sm:$0xff]
      %v381 = vmax.f32 %v377, %v380
      %s382 = sadd.s32 0, 24
      %s383 = scalar_lea.vmem %s326, %s382
      %v384 = vld [vmem:[%s383] sm:$0xff]
      %v385 = vmax.f32 %v381, %v384
      %s386 = sadd.s32 0, 32
      %s387 = scalar_lea.vmem %s326, %s386
      %v388 = vld [vmem:[%s387] sm:$0xff]
      %v389 = vmax.f32 %v385, %v388
      %s390 = sadd.s32 0, 40
      %s391 = scalar_lea.vmem %s326, %s390
      %v392 = vld [vmem:[%s391] sm:$0xff]
      %v393 = vmax.f32 %v389, %v392
      %v394 = vld [vmem:[%s333] sm:$0xff]
      %v395 = vcvt.f32.s32.to.zero.pseudo %v394
      %v396 = vsub.f32 %v373, %v393
      %v397 = vmul.f32 %v396, 1.442695
      %v398 = vpow.pop %v397
      %v399 = vadd.f32 %v398, 0.0
      %vm400 = vcmp.eq.s32.totalorder %v395, 0
      %v401 = vsel %vm400, %v373, 0.0
      %v402 = vstv %s361
      %v403 = vsel %vm400, %v402, 0.0
      %v404 = vsub.f32 %v376, %v393
      %v405 = vmul.f32 %v404, 1.442695
      %v406 = vpow.pop %v405
      %v407 = vadd.f32 %v399, %v406
      %vm408 = vcmp.eq.s32.totalorder %v395, 1
      %v409 = vsel %vm408, %v376, %v401
      %v410 = vstv %s362
      %v411 = vsel %vm408, %v410, %v403
      %v412 = vsub.f32 %v380, %v393
      %v413 = vmul.f32 %v412, 1.442695
      %v414 = vpow.pop %v413
      %v415 = vadd.f32 %v407, %v414
      %vm416 = vcmp.eq.s32.totalorder %v395, 2
      %v417 = vsel %vm416, %v380, %v409
      %v418 = vstv %s363
      %v419 = vsel %vm416, %v418, %v411
      %v420 = vsub.f32 %v384, %v393
      %v421 = vmul.f32 %v420, 1.442695
      %v422 = vpow.pop %v421
      %v423 = vadd.f32 %v415, %v422
      %vm424 = vcmp.eq.s32.totalorder %v395, 3
      %v425 = vsel %vm424, %v384, %v417
      %v426 = vstv %s364
      %v427 = vsel %vm424, %v426, %v419
      %v428 = vsub.f32 %v388, %v393
      %v429 = vmul.f32 %v428, 1.442695
      %v430 = vpow.pop %v429
      %v431 = vadd.f32 %v423, %v430
      %vm432 = vcmp.eq.s32.totalorder %v395, 4
      %v433 = vsel %vm432, %v388, %v425
      %v434 = vstv %s365
      %v435 = vsel %vm432, %v434, %v427
      %v436 = vsub.f32 %v392, %v393
      %v437 = vmul.f32 %v436, 1.442695
      %v438 = vpow.pop %v437
      %v439 = vadd.f32 %v431, %v438
      %vm440 = vcmp.eq.s32.totalorder %v395, 5
      %v441 = vsel %vm440, %v392, %v433
      %v442 = vstv %s366
      %v443 = vsel %vm440, %v442, %v435
      %v444 = vlog2.pop %v439
      %v445 = vmul.f32 %v444, 0.6931472
      %v446 = vadd.f32 %v445, %v393
      %s447 = smul.u32 0, 128
      %s448 = sadd.s32 %s360, %s447
      %s449 = ssub.s32 1024, %s448
      %v450 = vstv %s449
      %vm451 = vcmp.lt.s32.totalorder %v372, %v450
      %v452 = vld [vmem:[%s340] sm:$0xff]
      %vm453 = vcmp.ne.f32.partialorder %v452, 0.0
      %vm454 = vmand %vm451, %vm453
      %v455 = vld [vmem:[%s347] sm:$0xff]
      %v456 = vsel %vm454, %v455, 1.0
      %v457 = vrsqrt.pop %v456
      %v458 = vsub.f32 %v446, %v441
      %v459 = vmul.f32 %v443, %v457
      %v460 = vmul.f32 %v459, %v458
      %v461 = vsel %vm454, %v460, 0.0
      %v462 = vsel %vm454, %v443, 0.0
      %v463 = vadd.f32 %v461, 0.0
      %v464 = vadd.f32 %v462, 0.0
      %v465 = vrot.slane %v463, 4
      %v466 = vadd.f32 %v463, %v465
      %v467 = vrot.slane %v466, 2
      %v468 = vadd.f32 %v466, %v467
      %v469 = vrot.slane %v468, 1
      %v470 = vadd.f32 %v468, %v469
      %471 = vadd.xlane.f32.xlu0 %v470
      %v472 = vpop.xlane.xlu0 %471
      %vm473 = vcmask 0
      %474 = vst.msk [vmem:[%s353] sm:$0x1] %vm473, %v472
      %v475 = vrot.slane %v464, 4
      %v476 = vadd.f32 %v464, %v475
      %v477 = vrot.slane %v476, 2
      %v478 = vadd.f32 %v476, %v477
      %v479 = vrot.slane %v478, 1
      %v480 = vadd.f32 %v478, %v479
      %481 = vadd.xlane.f32.xlu0 %v480
      %v482 = vpop.xlane.xlu0 %481
      %483 = vst.msk [vmem:[%s359] sm:$0x1] %vm473, %v482
      %p484 = scmp.lt.s32.totalorder %s28, 1
      %s485 = scalar_select %p484, %s28, 1
      %p486 = scmp.lt.s32.totalorder %s29, 0
      %s487 = scalar_select %p486, %s29, 0
      %s488 = sadd.s32 %s487, %s485
      %s489 = scalar_lea.vmem %s5, %s488
      %p490 = scmp.lt.s32.totalorder %s28, 1
      %s491 = scalar_select %p490, %s28, 1
      %p492 = scmp.lt.s32.totalorder %s29, 0
      %s493 = scalar_select %p492, %s29, 0
      %s494 = sadd.s32 %s493, %s491
      %s495 = scalar_lea.vmem %s6, %s494
      // Predicated region
      $region37: #{watershed_energy_loss.1} parent=35 // pred_check
        %p496 = pneg %p168
      $region38: #{watershed_energy_loss.1} parent=35 // pred_check_branch
        %498 = sbr.rel (%p496) target = $region40
      $region39: #{watershed_energy_loss.1} parent=35 // pred_region
        _
      $region40: #{watershed_energy_loss.1} parent=35 // pred_fallthru
        _
      // Predicated region
      $region41: #{watershed_energy_loss.1} parent=35 // pred_check
        %p499 = pneg %p196
      $region42: #{watershed_energy_loss.1} parent=35 // pred_check_branch
        %501 = sbr.rel (%p499) target = $region44
      $region43: #{watershed_energy_loss.1} parent=35 // pred_region
        _
      $region44: #{watershed_energy_loss.1} parent=35 // pred_fallthru
        _
    $region36: #{watershed_energy_loss.1} parent=5 // pred_fallthru
      _
    %p502 = scmp.le.s32.totalorder 2, %s19
    // Predicated region
    $region45: #{watershed_energy_loss.1} parent=5 // pred_check
      %p503 = pneg %p502
    $region46: #{watershed_energy_loss.1} parent=5 // pred_check_branch
      %505 = sbr.rel (%p503) target = $region48
    $region47: #{watershed_energy_loss.1} parent=5 // pred_region
      %s506 = ssub.s32 %s19, 2
      // Predicated region
      $region49: #{watershed_energy_loss.1} parent=47 // pred_check
        %p507 = pneg %p174
      $region50: #{watershed_energy_loss.1} parent=47 // pred_check_branch
        %509 = sbr.rel (%p507) target = $region52
      $region51: #{watershed_energy_loss.1} parent=47 // pred_region
        %p510 = scmp.lt.s32.totalorder %s30, 1
        %s511 = scalar_select %p510, %s30, 1
        %p512 = scmp.lt.s32.totalorder %s31, 0
        %s513 = scalar_select %p512, %s31, 0
        %s514 = sadd.s32 %s513, %s511
        %s515 = scalar_lea.vmem %s5, %s514
      $region52: #{watershed_energy_loss.1} parent=47 // pred_fallthru
        _
      // Predicated region
      $region53: #{watershed_energy_loss.1} parent=47 // pred_check
        %p516 = pneg %p202
      $region54: #{watershed_energy_loss.1} parent=47 // pred_check_branch
        %518 = sbr.rel (%p516) target = $region56
      $region55: #{watershed_energy_loss.1} parent=47 // pred_region
        %p519 = scmp.lt.s32.totalorder %s30, 1
        %s520 = scalar_select %p519, %s30, 1
        %p521 = scmp.lt.s32.totalorder %s31, 0
        %s522 = scalar_select %p521, %s31, 0
        %s523 = sadd.s32 %s522, %s520
        %s524 = scalar_lea.vmem %s6, %s523
      $region56: #{watershed_energy_loss.1} parent=47 // pred_fallthru
        _
    $region48: #{watershed_energy_loss.1} parent=5 // pred_fallthru
      _
  $region6: #{watershed_energy_loss.1} parent=0 // loop_footer
    %s23 = sadd.s32 1, %s19
  $region7: #{watershed_energy_loss.1} parent=0 // loop_footer_branch
    %18 = sbr.rel target = $region3
  $region8: #{watershed_energy_loss.1} parent=0 // loop_exit
    _

</llo_original>
